<compile_context>
chip_gen: v7x
topology: tpu7x:2x2x1
jax: 0.10.0
libtpu: 0.0.40
codegen_flags: <defaults>
</compile_context>

<pallas_src>
import numpy as np
import jax
import jax.numpy as jnp
from jax.experimental import pallas as pl
from jax.experimental.pallas import tpu as pltpu


def _round_up8(n):
    return -(-n // 8) * 8


def _lstm_mlp_kernel(x_ref, hc0_ref, w_ref, out_ref, hcn_ref):
    BP = hc0_ref.shape[1]                 # padded batch (multiple of 8)
    H = hc0_ref.shape[2]
    S = x_ref.shape[0] // BP
    I = x_ref.shape[1]
    O = out_ref.shape[1]

    # Static row offsets into the packed parameter buffer (8-row aligned).
    Ip, Hp = _round_up8(I), _round_up8(H)
    o_wih = 0
    o_whh = Ip
    o_b = Ip + Hp
    o_wmlp = Ip + Hp + 8
    o_bmlp = Ip + Hp + 8 + Hp

    wih = w_ref[o_wih:o_wih + I, :]            # (I, 4H)
    whh = w_ref[o_whh:o_whh + H, :]            # (H, 4H), read once
    b = w_ref[o_b:o_b + 1, :]                  # (1, 4H) fused LSTM bias
    wmlp = w_ref[o_wmlp:o_wmlp + H, :]         # (H, 4H); cols >= O are zero
    bmlp = w_ref[o_bmlp:o_bmlp + 1, :]         # (1, 4H); cols >= O are zero

    # Hoisted input projection: one matmul covering every timestep.
    xg = jnp.dot(x_ref[...], wih, preferred_element_type=jnp.float32) + b  # (S*BP, 4H)

    h = hc0_ref[0]                             # (BP, H)
    c = hc0_ref[1]                             # (BP, H)

    # Fully-unrolled time loop (S is a small static constant); h/c live in
    # vregs across steps, per-step h is collected in a Python list (vregs),
    # not a VMEM scratch.
    hs = []
    for t in range(S):
        g = xg[t * BP:(t + 1) * BP, :] + jnp.dot(
            h, whh, preferred_element_type=jnp.float32)        # (BP, 4H)
        # Gate columns pre-permuted to [i, f, o, g]: sigmoid block contiguous.
        sg = jax.nn.sigmoid(g[:, :3 * H])
        i_g = sg[:, 0 * H:1 * H]
        f_g = sg[:, 1 * H:2 * H]
        o_g = sg[:, 2 * H:3 * H]
        g_g = jnp.tanh(g[:, 3 * H:])
        c = f_g * c + i_g * g_g
        h = o_g * jnp.tanh(c)
        hs.append(h)

    # Fused final-state output: (2, BP, H).
    hcn_ref[0] = h
    hcn_ref[1] = c

    # Batched MLP head: one matmul + one store for the whole output slab.
    hall = jnp.concatenate(hs, axis=0)                          # (S*BP, H)
    head = jnp.dot(hall, wmlp, preferred_element_type=jnp.float32) + bmlp
    out_ref[...] = head[:, :O].astype(out_ref.dtype)


def lstm_mlp_forward(inp, params, hid=None):
    """inp: (S, B, I) f32. params: dict from prepare_kernel_params.
    hid: optional (h0, c0), each (1, B, H) (PyTorch convention).
    Returns (out (S, B, O), (h_n, c_n) each (1, B, H))."""
    S, B, I = inp.shape
    H = params["hidden_dim"]
    O = params["output_dim"]
    BP = _round_up8(B)                     # pad batch to full sublane tiles

    # Pad batch rows with zeros (independent rows; padding never leaks into
    # real rows), flatten time into the sublane axis.
    x_pad = jnp.zeros((S, BP, I), jnp.float32).at[:, :B, :].set(
        inp.astype(jnp.float32))
    x2d = x_pad.reshape(S * BP, I)

    hc0 = jnp.zeros((2, BP, H), jnp.float32)
    if hid is not None:
        hc0 = hc0.at[0, :B, :].set(hid[0].reshape(B, H).astype(jnp.float32))
        hc0 = hc0.at[1, :B, :].set(hid[1].reshape(B, H).astype(jnp.float32))

    vmem = pl.BlockSpec(memory_space=pltpu.MemorySpace.VMEM)
    out_pad, hcn = pl.pallas_call(
        _lstm_mlp_kernel,
        out_shape=(
            jax.ShapeDtypeStruct((S * BP, O), jnp.float32),   # out (padded)
            jax.ShapeDtypeStruct((2, BP, H), jnp.float32),    # (h_n, c_n)
        ),
        in_specs=[vmem, vmem, vmem],        # 3 input DMAs, all VMEM-resident
        out_specs=(vmem, vmem),             # 2 output DMAs
    )(x2d, hc0, params["packed"])

    out = out_pad.reshape(S, BP, O)[:, :B, :]
    h_n = hcn[0, :B, :][None]
    c_n = hcn[1, :B, :][None]
    return out, (h_n, c_n)


# ---------------------------------------------------------------------------
# Parameter construction (PyTorch layout) and conversion to kernel layout.
# ---------------------------------------------------------------------------
def make_torch_params(key, input_dim, hidden_dim, output_dim):
    """Deterministic init mimicking PyTorch U(-1/sqrt(H), 1/sqrt(H)),
    in native PyTorch layout / gate order [i, f, g, o]."""
    ks = jax.random.split(key, 6)
    bound = 1.0 / np.sqrt(hidden_dim)
    u = lambda k, shape: jax.random.uniform(k, shape, jnp.float32, -bound, bound)
    return {
        "w_ih": u(ks[0], (4 * hidden_dim, input_dim)),    # weight_ih_l0
        "w_hh": u(ks[1], (4 * hidden_dim, hidden_dim)),   # weight_hh_l0
        "b_ih": u(ks[2], (4 * hidden_dim,)),
        "b_hh": u(ks[3], (4 * hidden_dim,)),
        "w_mlp": u(ks[4], (output_dim, hidden_dim)),      # nn.Linear weight
        "b_mlp": u(ks[5], (output_dim,)),
    }


def prepare_kernel_params(p, hidden_dim):
    """Transpose weights, fuse the two LSTM biases, permute gate columns from
    PyTorch's [i, f, g, o] to [i, f, o, g], and pack everything into ONE
    contiguous (R, 4H) f32 buffer with 8-row-aligned segment offsets."""
    H = hidden_dim
    I = p["w_ih"].shape[1]
    O = p["w_mlp"].shape[0]
    C = 4 * H
    assert O <= C, "output_dim must fit in the packed buffer width (4*hidden)"

    perm = np.concatenate([
        np.arange(0, 2 * H),        # i, f
        np.arange(3 * H, 4 * H),    # o
        np.arange(2 * H, 3 * H),    # g
    ])
    wih_t = np.asarray(p["w_ih"]).T[:, perm]                     # (I, 4H)
    whh_t = np.asarray(p["w_hh"]).T[:, perm]                     # (H, 4H)
    b = (np.asarray(p["b_ih"]) + np.asarray(p["b_hh"]))[perm]    # (4H,)
    wmlp_t = np.asarray(p["w_mlp"]).T                            # (H, O)
    bmlp = np.asarray(p["b_mlp"])                                # (O,)

    Ip, Hp = _round_up8(I), _round_up8(H)
    R = Ip + Hp + 8 + Hp + 8
    W = np.zeros((R, C), np.float32)
    o = 0
    W[o:o + I, :] = wih_t;        o = Ip
    W[o:o + H, :] = whh_t;        o = Ip + Hp
    W[o, :] = b;                  o = Ip + Hp + 8
    W[o:o + H, :O] = wmlp_t;      o = Ip + Hp + 8 + Hp
    W[o, :O] = bmlp

    return {
        "packed": jnp.asarray(W),
        "input_dim": I,
        "hidden_dim": H,
        "output_dim": O,
    }


# ---------------------------------------------------------------------------
# Pure-JAX reference reproducing PyTorch nn.LSTM + nn.Linear semantics
# (native gate order [i, f, g, o], separate biases).
# ---------------------------------------------------------------------------
def _reference_forward(inp, p, hid=None):
    S, B, _ = inp.shape
    H = p["w_hh"].shape[1]
    if hid is None:
        h = jnp.zeros((B, H), jnp.float32)
        c = jnp.zeros((B, H), jnp.float32)
    else:
        h = hid[0].reshape(B, H)
        c = hid[1].reshape(B, H)
    wih_t, whh_t = p["w_ih"].T, p["w_hh"].T
    b = (p["b_ih"] + p["b_hh"])[None, :]
    outs = []
    for t in range(S):
        gates = inp[t] @ wih_t + h @ whh_t + b
        i_g = jax.nn.sigmoid(gates[:, 0 * H:1 * H])
        f_g = jax.nn.sigmoid(gates[:, 1 * H:2 * H])
        g_g = jnp.tanh(gates[:, 2 * H:3 * H])
        o_g = jax.nn.sigmoid(gates[:, 3 * H:4 * H])
        c = f_g * c + i_g * g_g
        h = o_g * jnp.tanh(c)
        outs.append(h @ p["w_mlp"].T + p["b_mlp"][None, :])
    return jnp.stack(outs, 0), (h[None], c[None])


if __name__ == "__main__":
    SEQ, BATCH, INPUT_DIM, HIDDEN_DIM, OUTPUT_DIM = 8, 4, 16, 32, 8

    key = jax.random.PRNGKey(0)
    k_x, k_p, k_h, k_c = jax.random.split(key, 4)
    inp = jax.random.normal(k_x, (SEQ, BATCH, INPUT_DIM), jnp.float32)
    torch_params = make_torch_params(k_p, INPUT_DIM, HIDDEN_DIM, OUTPUT_DIM)
    kparams = prepare_kernel_params(torch_params, HIDDEN_DIM)

    # hid=None path (PyTorch default zero initial state).
    out, (h_n, c_n) = lstm_mlp_forward(inp, kparams)
    jax.block_until_ready((out, h_n, c_n))
    ref_out, (ref_h, ref_c) = _reference_forward(inp, torch_params)
    np.testing.assert_allclose(np.asarray(out), np.asarray(ref_out), rtol=1e-3, atol=1e-3)
    np.testing.assert_allclose(np.asarray(h_n), np.asarray(ref_h), rtol=1e-3, atol=1e-3)
    np.testing.assert_allclose(np.asarray(c_n), np.asarray(ref_c), rtol=1e-3, atol=1e-3)

    # Explicit hid path (forward(inp, hid)).
    h0 = 0.1 * jax.random.normal(k_h, (1, BATCH, HIDDEN_DIM), jnp.float32)
    c0 = 0.1 * jax.random.normal(k_c, (1, BATCH, HIDDEN_DIM), jnp.float32)
    out2, (h_n2, c_n2) = lstm_mlp_forward(inp, kparams, hid=(h0, c0))
    jax.block_until_ready((out2, h_n2, c_n2))
    ref_out2, (ref_h2, ref_c2) = _reference_forward(inp, torch_params, hid=(h0, c0))
    np.testing.assert_allclose(np.asarray(out2), np.asarray(ref_out2), rtol=1e-3, atol=1e-3)
    np.testing.assert_allclose(np.asarray(h_n2), np.asarray(ref_h2), rtol=1e-3, atol=1e-3)
    np.testing.assert_allclose(np.asarray(c_n2), np.asarray(ref_c2), rtol=1e-3, atol=1e-3)

    print("KERNEL_OK")
</pallas_src>

<mosaic_0001>
module attributes {stable_mosaic.version = 11 : i64} {
  func.func @_lstm_mlp_kernel(%arg0: memref<64x16xf32, #tpu.memory_space<vmem>>, %arg1: memref<2x8x32xf32, #tpu.memory_space<vmem>>, %arg2: memref<96x128xf32, #tpu.memory_space<vmem>>, %arg3: memref<64x8xf32, #tpu.memory_space<vmem>>, %arg4: memref<2x8x32xf32, #tpu.memory_space<vmem>>) attributes {dimension_semantics = [], scalar_prefetch = 0 : i64, scratch_operands = 0 : i64, tpu.core_type = #tpu.core_type<tc>} {
    %c0 = arith.constant 0 : index
    %c0_0 = arith.constant 0 : index
    %0 = vector.load %arg2[%c0, %c0_0] : memref<96x128xf32, #tpu.memory_space<vmem>>, vector<16x128xf32>
    %c16 = arith.constant 16 : index
    %c0_1 = arith.constant 0 : index
    %1 = vector.load %arg2[%c16, %c0_1] : memref<96x128xf32, #tpu.memory_space<vmem>>, vector<32x128xf32>
    %c48 = arith.constant 48 : index
    %c0_2 = arith.constant 0 : index
    %2 = vector.load %arg2[%c48, %c0_2] : memref<96x128xf32, #tpu.memory_space<vmem>>, vector<1x128xf32>
    %c56 = arith.constant 56 : index
    %c0_3 = arith.constant 0 : index
    %3 = vector.load %arg2[%c56, %c0_3] : memref<96x128xf32, #tpu.memory_space<vmem>>, vector<32x128xf32>
    %c88 = arith.constant 88 : index
    %c0_4 = arith.constant 0 : index
    %4 = vector.load %arg2[%c88, %c0_4] : memref<96x128xf32, #tpu.memory_space<vmem>>, vector<1x128xf32>
    %c0_5 = arith.constant 0 : index
    %c0_6 = arith.constant 0 : index
    %5 = vector.load %arg0[%c0_5, %c0_6] : memref<64x16xf32, #tpu.memory_space<vmem>>, vector<64x16xf32>
    %cst = arith.constant dense<0.000000e+00> : vector<64x128xf32>
    %6 = tpu.matmul %5, %0, %cst {dimension_numbers = #tpu.dot_dimension_numbers<[1], [0], [0], [1], [0, 0, 1, 1], [], []>} : vector<64x16xf32>, vector<16x128xf32>, vector<64x128xf32> -> vector<64x128xf32>
    %7 = vector.broadcast %2 : vector<1x128xf32> to vector<64x128xf32>
    %8 = arith.addf %6, %7 : vector<64x128xf32>
    %c0_7 = arith.constant 0 : index
    %c0_8 = arith.constant 0 : index
    %c0_9 = arith.constant 0 : index
    %9 = vector.load %arg1[%c0_7, %c0_8, %c0_9] : memref<2x8x32xf32, #tpu.memory_space<vmem>>, vector<1x8x32xf32>
    %10 = vector.shape_cast %9 : vector<1x8x32xf32> to vector<8x32xf32>
    %c1 = arith.constant 1 : index
    %c0_10 = arith.constant 0 : index
    %c0_11 = arith.constant 0 : index
    %11 = vector.load %arg1[%c1, %c0_10, %c0_11] : memref<2x8x32xf32, #tpu.memory_space<vmem>>, vector<1x8x32xf32>
    %12 = vector.shape_cast %11 : vector<1x8x32xf32> to vector<8x32xf32>
    %13 = vector.extract_strided_slice %8 {offsets = [0, 0], sizes = [8, 128], strides = [1, 1]} : vector<64x128xf32> to vector<8x128xf32>
    %cst_12 = arith.constant dense<0.000000e+00> : vector<8x128xf32>
    %14 = tpu.matmul %10, %1, %cst_12 {dimension_numbers = #tpu.dot_dimension_numbers<[1], [0], [0], [1], [0, 0, 1, 1], [], []>} : vector<8x32xf32>, vector<32x128xf32>, vector<8x128xf32> -> vector<8x128xf32>
    %15 = arith.addf %13, %14 : vector<8x128xf32>
    %16 = vector.extract_strided_slice %15 {offsets = [0, 0], sizes = [8, 96], strides = [1, 1]} : vector<8x128xf32> to vector<8x96xf32>
    %17 = arith.negf %16 : vector<8x96xf32>
    %18 = math.exp %17 : vector<8x96xf32>
    %cst_13 = arith.constant 1.000000e+00 : f32
    %19 = vector.broadcast %cst_13 : f32 to vector<8x96xf32>
    %20 = arith.addf %19, %18 : vector<8x96xf32>
    %21 = arith.divf %19, %20 : vector<8x96xf32>
    %22 = vector.extract_strided_slice %21 {offsets = [0, 0], sizes = [8, 32], strides = [1, 1]} : vector<8x96xf32> to vector<8x32xf32>
    %23 = vector.extract_strided_slice %21 {offsets = [0, 32], sizes = [8, 32], strides = [1, 1]} : vector<8x96xf32> to vector<8x32xf32>
    %24 = vector.extract_strided_slice %21 {offsets = [0, 64], sizes = [8, 32], strides = [1, 1]} : vector<8x96xf32> to vector<8x32xf32>
    %25 = vector.extract_strided_slice %15 {offsets = [0, 96], sizes = [8, 32], strides = [1, 1]} : vector<8x128xf32> to vector<8x32xf32>
    %26 = math.tanh %25 : vector<8x32xf32>
    %27 = arith.mulf %23, %12 : vector<8x32xf32>
    %28 = arith.mulf %22, %26 : vector<8x32xf32>
    %29 = arith.addf %27, %28 : vector<8x32xf32>
    %30 = math.tanh %29 : vector<8x32xf32>
    %31 = arith.mulf %24, %30 : vector<8x32xf32>
    %32 = vector.extract_strided_slice %8 {offsets = [8, 0], sizes = [8, 128], strides = [1, 1]} : vector<64x128xf32> to vector<8x128xf32>
    %cst_14 = arith.constant dense<0.000000e+00> : vector<8x128xf32>
    %33 = tpu.matmul %31, %1, %cst_14 {dimension_numbers = #tpu.dot_dimension_numbers<[1], [0], [0], [1], [0, 0, 1, 1], [], []>} : vector<8x32xf32>, vector<32x128xf32>, vector<8x128xf32> -> vector<8x128xf32>
    %34 = arith.addf %32, %33 : vector<8x128xf32>
    %35 = vector.extract_strided_slice %34 {offsets = [0, 0], sizes = [8, 96], strides = [1, 1]} : vector<8x128xf32> to vector<8x96xf32>
    %36 = arith.negf %35 : vector<8x96xf32>
    %37 = math.exp %36 : vector<8x96xf32>
    %cst_15 = arith.constant 1.000000e+00 : f32
    %38 = vector.broadcast %cst_15 : f32 to vector<8x96xf32>
    %39 = arith.addf %38, %37 : vector<8x96xf32>
    %40 = arith.divf %38, %39 : vector<8x96xf32>
    %41 = vector.extract_strided_slice %40 {offsets = [0, 0], sizes = [8, 32], strides = [1, 1]} : vector<8x96xf32> to vector<8x32xf32>
    %42 = vector.extract_strided_slice %40 {offsets = [0, 32], sizes = [8, 32], strides = [1, 1]} : vector<8x96xf32> to vector<8x32xf32>
    %43 = vector.extract_strided_slice %40 {offsets = [0, 64], sizes = [8, 32], strides = [1, 1]} : vector<8x96xf32> to vector<8x32xf32>
    %44 = vector.extract_strided_slice %34 {offsets = [0, 96], sizes = [8, 32], strides = [1, 1]} : vector<8x128xf32> to vector<8x32xf32>
    %45 = math.tanh %44 : vector<8x32xf32>
    %46 = arith.mulf %42, %29 : vector<8x32xf32>
    %47 = arith.mulf %41, %45 : vector<8x32xf32>
    %48 = arith.addf %46, %47 : vector<8x32xf32>
    %49 = math.tanh %48 : vector<8x32xf32>
    %50 = arith.mulf %43, %49 : vector<8x32xf32>
    %51 = vector.extract_strided_slice %8 {offsets = [16, 0], sizes = [8, 128], strides = [1, 1]} : vector<64x128xf32> to vector<8x128xf32>
    %cst_16 = arith.constant dense<0.000000e+00> : vector<8x128xf32>
    %52 = tpu.matmul %50, %1, %cst_16 {dimension_numbers = #tpu.dot_dimension_numbers<[1], [0], [0], [1], [0, 0, 1, 1], [], []>} : vector<8x32xf32>, vector<32x128xf32>, vector<8x128xf32> -> vector<8x128xf32>
    %53 = arith.addf %51, %52 : vector<8x128xf32>
    %54 = vector.extract_strided_slice %53 {offsets = [0, 0], sizes = [8, 96], strides = [1, 1]} : vector<8x128xf32> to vector<8x96xf32>
    %55 = arith.negf %54 : vector<8x96xf32>
    %56 = math.exp %55 : vector<8x96xf32>
    %cst_17 = arith.constant 1.000000e+00 : f32
    %57 = vector.broadcast %cst_17 : f32 to vector<8x96xf32>
    %58 = arith.addf %57, %56 : vector<8x96xf32>
    %59 = arith.divf %57, %58 : vector<8x96xf32>
    %60 = vector.extract_strided_slice %59 {offsets = [0, 0], sizes = [8, 32], strides = [1, 1]} : vector<8x96xf32> to vector<8x32xf32>
    %61 = vector.extract_strided_slice %59 {offsets = [0, 32], sizes = [8, 32], strides = [1, 1]} : vector<8x96xf32> to vector<8x32xf32>
    %62 = vector.extract_strided_slice %59 {offsets = [0, 64], sizes = [8, 32], strides = [1, 1]} : vector<8x96xf32> to vector<8x32xf32>
    %63 = vector.extract_strided_slice %53 {offsets = [0, 96], sizes = [8, 32], strides = [1, 1]} : vector<8x128xf32> to vector<8x32xf32>
    %64 = math.tanh %63 : vector<8x32xf32>
    %65 = arith.mulf %61, %48 : vector<8x32xf32>
    %66 = arith.mulf %60, %64 : vector<8x32xf32>
    %67 = arith.addf %65, %66 : vector<8x32xf32>
    %68 = math.tanh %67 : vector<8x32xf32>
    %69 = arith.mulf %62, %68 : vector<8x32xf32>
    %70 = vector.extract_strided_slice %8 {offsets = [24, 0], sizes = [8, 128], strides = [1, 1]} : vector<64x128xf32> to vector<8x128xf32>
    %cst_18 = arith.constant dense<0.000000e+00> : vector<8x128xf32>
    %71 = tpu.matmul %69, %1, %cst_18 {dimension_numbers = #tpu.dot_dimension_numbers<[1], [0], [0], [1], [0, 0, 1, 1], [], []>} : vector<8x32xf32>, vector<32x128xf32>, vector<8x128xf32> -> vector<8x128xf32>
    %72 = arith.addf %70, %71 : vector<8x128xf32>
    %73 = vector.extract_strided_slice %72 {offsets = [0, 0], sizes = [8, 96], strides = [1, 1]} : vector<8x128xf32> to vector<8x96xf32>
    %74 = arith.negf %73 : vector<8x96xf32>
    %75 = math.exp %74 : vector<8x96xf32>
    %cst_19 = arith.constant 1.000000e+00 : f32
    %76 = vector.broadcast %cst_19 : f32 to vector<8x96xf32>
    %77 = arith.addf %76, %75 : vector<8x96xf32>
    %78 = arith.divf %76, %77 : vector<8x96xf32>
    %79 = vector.extract_strided_slice %78 {offsets = [0, 0], sizes = [8, 32], strides = [1, 1]} : vector<8x96xf32> to vector<8x32xf32>
    %80 = vector.extract_strided_slice %78 {offsets = [0, 32], sizes = [8, 32], strides = [1, 1]} : vector<8x96xf32> to vector<8x32xf32>
    %81 = vector.extract_strided_slice %78 {offsets = [0, 64], sizes = [8, 32], strides = [1, 1]} : vector<8x96xf32> to vector<8x32xf32>
    %82 = vector.extract_strided_slice %72 {offsets = [0, 96], sizes = [8, 32], strides = [1, 1]} : vector<8x128xf32> to vector<8x32xf32>
    %83 = math.tanh %82 : vector<8x32xf32>
    %84 = arith.mulf %80, %67 : vector<8x32xf32>
    %85 = arith.mulf %79, %83 : vector<8x32xf32>
    %86 = arith.addf %84, %85 : vector<8x32xf32>
    %87 = math.tanh %86 : vector<8x32xf32>
    %88 = arith.mulf %81, %87 : vector<8x32xf32>
    %89 = vector.extract_strided_slice %8 {offsets = [32, 0], sizes = [8, 128], strides = [1, 1]} : vector<64x128xf32> to vector<8x128xf32>
    %cst_20 = arith.constant dense<0.000000e+00> : vector<8x128xf32>
    %90 = tpu.matmul %88, %1, %cst_20 {dimension_numbers = #tpu.dot_dimension_numbers<[1], [0], [0], [1], [0, 0, 1, 1], [], []>} : vector<8x32xf32>, vector<32x128xf32>, vector<8x128xf32> -> vector<8x128xf32>
    %91 = arith.addf %89, %90 : vector<8x128xf32>
    %92 = vector.extract_strided_slice %91 {offsets = [0, 0], sizes = [8, 96], strides = [1, 1]} : vector<8x128xf32> to vector<8x96xf32>
    %93 = arith.negf %92 : vector<8x96xf32>
    %94 = math.exp %93 : vector<8x96xf32>
    %cst_21 = arith.constant 1.000000e+00 : f32
    %95 = vector.broadcast %cst_21 : f32 to vector<8x96xf32>
    %96 = arith.addf %95, %94 : vector<8x96xf32>
    %97 = arith.divf %95, %96 : vector<8x96xf32>
    %98 = vector.extract_strided_slice %97 {offsets = [0, 0], sizes = [8, 32], strides = [1, 1]} : vector<8x96xf32> to vector<8x32xf32>
    %99 = vector.extract_strided_slice %97 {offsets = [0, 32], sizes = [8, 32], strides = [1, 1]} : vector<8x96xf32> to vector<8x32xf32>
    %100 = vector.extract_strided_slice %97 {offsets = [0, 64], sizes = [8, 32], strides = [1, 1]} : vector<8x96xf32> to vector<8x32xf32>
    %101 = vector.extract_strided_slice %91 {offsets = [0, 96], sizes = [8, 32], strides = [1, 1]} : vector<8x128xf32> to vector<8x32xf32>
    %102 = math.tanh %101 : vector<8x32xf32>
    %103 = arith.mulf %99, %86 : vector<8x32xf32>
    %104 = arith.mulf %98, %102 : vector<8x32xf32>
    %105 = arith.addf %103, %104 : vector<8x32xf32>
    %106 = math.tanh %105 : vector<8x32xf32>
    %107 = arith.mulf %100, %106 : vector<8x32xf32>
    %108 = vector.extract_strided_slice %8 {offsets = [40, 0], sizes = [8, 128], strides = [1, 1]} : vector<64x128xf32> to vector<8x128xf32>
    %cst_22 = arith.constant dense<0.000000e+00> : vector<8x128xf32>
    %109 = tpu.matmul %107, %1, %cst_22 {dimension_numbers = #tpu.dot_dimension_numbers<[1], [0], [0], [1], [0, 0, 1, 1], [], []>} : vector<8x32xf32>, vector<32x128xf32>, vector<8x128xf32> -> vector<8x128xf32>
    %110 = arith.addf %108, %109 : vector<8x128xf32>
    %111 = vector.extract_strided_slice %110 {offsets = [0, 0], sizes = [8, 96], strides = [1, 1]} : vector<8x128xf32> to vector<8x96xf32>
    %112 = arith.negf %111 : vector<8x96xf32>
    %113 = math.exp %112 : vector<8x96xf32>
    %cst_23 = arith.constant 1.000000e+00 : f32
    %114 = vector.broadcast %cst_23 : f32 to vector<8x96xf32>
    %115 = arith.addf %114, %113 : vector<8x96xf32>
    %116 = arith.divf %114, %115 : vector<8x96xf32>
    %117 = vector.extract_strided_slice %116 {offsets = [0, 0], sizes = [8, 32], strides = [1, 1]} : vector<8x96xf32> to vector<8x32xf32>
    %118 = vector.extract_strided_slice %116 {offsets = [0, 32], sizes = [8, 32], strides = [1, 1]} : vector<8x96xf32> to vector<8x32xf32>
    %119 = vector.extract_strided_slice %116 {offsets = [0, 64], sizes = [8, 32], strides = [1, 1]} : vector<8x96xf32> to vector<8x32xf32>
    %120 = vector.extract_strided_slice %110 {offsets = [0, 96], sizes = [8, 32], strides = [1, 1]} : vector<8x128xf32> to vector<8x32xf32>
    %121 = math.tanh %120 : vector<8x32xf32>
    %122 = arith.mulf %118, %105 : vector<8x32xf32>
    %123 = arith.mulf %117, %121 : vector<8x32xf32>
    %124 = arith.addf %122, %123 : vector<8x32xf32>
    %125 = math.tanh %124 : vector<8x32xf32>
    %126 = arith.mulf %119, %125 : vector<8x32xf32>
    %127 = vector.extract_strided_slice %8 {offsets = [48, 0], sizes = [8, 128], strides = [1, 1]} : vector<64x128xf32> to vector<8x128xf32>
    %cst_24 = arith.constant dense<0.000000e+00> : vector<8x128xf32>
    %128 = tpu.matmul %126, %1, %cst_24 {dimension_numbers = #tpu.dot_dimension_numbers<[1], [0], [0], [1], [0, 0, 1, 1], [], []>} : vector<8x32xf32>, vector<32x128xf32>, vector<8x128xf32> -> vector<8x128xf32>
    %129 = arith.addf %127, %128 : vector<8x128xf32>
    %130 = vector.extract_strided_slice %129 {offsets = [0, 0], sizes = [8, 96], strides = [1, 1]} : vector<8x128xf32> to vector<8x96xf32>
    %131 = arith.negf %130 : vector<8x96xf32>
    %132 = math.exp %131 : vector<8x96xf32>
    %cst_25 = arith.constant 1.000000e+00 : f32
    %133 = vector.broadcast %cst_25 : f32 to vector<8x96xf32>
    %134 = arith.addf %133, %132 : vector<8x96xf32>
    %135 = arith.divf %133, %134 : vector<8x96xf32>
    %136 = vector.extract_strided_slice %135 {offsets = [0, 0], sizes = [8, 32], strides = [1, 1]} : vector<8x96xf32> to vector<8x32xf32>
    %137 = vector.extract_strided_slice %135 {offsets = [0, 32], sizes = [8, 32], strides = [1, 1]} : vector<8x96xf32> to vector<8x32xf32>
    %138 = vector.extract_strided_slice %135 {offsets = [0, 64], sizes = [8, 32], strides = [1, 1]} : vector<8x96xf32> to vector<8x32xf32>
    %139 = vector.extract_strided_slice %129 {offsets = [0, 96], sizes = [8, 32], strides = [1, 1]} : vector<8x128xf32> to vector<8x32xf32>
    %140 = math.tanh %139 : vector<8x32xf32>
    %141 = arith.mulf %137, %124 : vector<8x32xf32>
    %142 = arith.mulf %136, %140 : vector<8x32xf32>
    %143 = arith.addf %141, %142 : vector<8x32xf32>
    %144 = math.tanh %143 : vector<8x32xf32>
    %145 = arith.mulf %138, %144 : vector<8x32xf32>
    %146 = vector.extract_strided_slice %8 {offsets = [56, 0], sizes = [8, 128], strides = [1, 1]} : vector<64x128xf32> to vector<8x128xf32>
    %cst_26 = arith.constant dense<0.000000e+00> : vector<8x128xf32>
    %147 = tpu.matmul %145, %1, %cst_26 {dimension_numbers = #tpu.dot_dimension_numbers<[1], [0], [0], [1], [0, 0, 1, 1], [], []>} : vector<8x32xf32>, vector<32x128xf32>, vector<8x128xf32> -> vector<8x128xf32>
    %148 = arith.addf %146, %147 : vector<8x128xf32>
    %149 = vector.extract_strided_slice %148 {offsets = [0, 0], sizes = [8, 96], strides = [1, 1]} : vector<8x128xf32> to vector<8x96xf32>
    %150 = arith.negf %149 : vector<8x96xf32>
    %151 = math.exp %150 : vector<8x96xf32>
    %cst_27 = arith.constant 1.000000e+00 : f32
    %152 = vector.broadcast %cst_27 : f32 to vector<8x96xf32>
    %153 = arith.addf %152, %151 : vector<8x96xf32>
    %154 = arith.divf %152, %153 : vector<8x96xf32>
    %155 = vector.extract_strided_slice %154 {offsets = [0, 0], sizes = [8, 32], strides = [1, 1]} : vector<8x96xf32> to vector<8x32xf32>
    %156 = vector.extract_strided_slice %154 {offsets = [0, 32], sizes = [8, 32], strides = [1, 1]} : vector<8x96xf32> to vector<8x32xf32>
    %157 = vector.extract_strided_slice %154 {offsets = [0, 64], sizes = [8, 32], strides = [1, 1]} : vector<8x96xf32> to vector<8x32xf32>
    %158 = vector.extract_strided_slice %148 {offsets = [0, 96], sizes = [8, 32], strides = [1, 1]} : vector<8x128xf32> to vector<8x32xf32>
    %159 = math.tanh %158 : vector<8x32xf32>
    %160 = arith.mulf %156, %143 : vector<8x32xf32>
    %161 = arith.mulf %155, %159 : vector<8x32xf32>
    %162 = arith.addf %160, %161 : vector<8x32xf32>
    %163 = math.tanh %162 : vector<8x32xf32>
    %164 = arith.mulf %157, %163 : vector<8x32xf32>
    %c0_28 = arith.constant 0 : index
    %c0_29 = arith.constant 0 : index
    %c0_30 = arith.constant 0 : index
    %165 = vector.load %arg4[%c0_28, %c0_29, %c0_30] : memref<2x8x32xf32, #tpu.memory_space<vmem>>, vector<1x8x32xf32>
    %166 = vector.shape_cast %165 : vector<1x8x32xf32> to vector<8x32xf32>
    %167 = vector.shape_cast %164 : vector<8x32xf32> to vector<1x8x32xf32>
    tpu.vector_store %arg4[%c0_28, %c0_29, %c0_30], %167 {strides = array<i32>} : memref<2x8x32xf32, #tpu.memory_space<vmem>>, vector<1x8x32xf32>,
    %c1_31 = arith.constant 1 : index
    %c0_32 = arith.constant 0 : index
    %c0_33 = arith.constant 0 : index
    %168 = vector.load %arg4[%c1_31, %c0_32, %c0_33] : memref<2x8x32xf32, #tpu.memory_space<vmem>>, vector<1x8x32xf32>
    %169 = vector.shape_cast %168 : vector<1x8x32xf32> to vector<8x32xf32>
    %170 = vector.shape_cast %162 : vector<8x32xf32> to vector<1x8x32xf32>
    tpu.vector_store %arg4[%c1_31, %c0_32, %c0_33], %170 {strides = array<i32>} : memref<2x8x32xf32, #tpu.memory_space<vmem>>, vector<1x8x32xf32>,
    %171 = tpu.concatenate %31, %50, %69, %88, %107, %126, %145, %164 in 0 : vector<8x32xf32>, vector<8x32xf32>, vector<8x32xf32>, vector<8x32xf32>, vector<8x32xf32>, vector<8x32xf32>, vector<8x32xf32>, vector<8x32xf32> -> vector<64x32xf32>
    %cst_34 = arith.constant dense<0.000000e+00> : vector<64x128xf32>
    %172 = tpu.matmul %171, %3, %cst_34 {dimension_numbers = #tpu.dot_dimension_numbers<[1], [0], [0], [1], [0, 0, 1, 1], [], []>} : vector<64x32xf32>, vector<32x128xf32>, vector<64x128xf32> -> vector<64x128xf32>
    %173 = vector.broadcast %4 : vector<1x128xf32> to vector<64x128xf32>
    %174 = arith.addf %172, %173 : vector<64x128xf32>
    %175 = vector.extract_strided_slice %174 {offsets = [0, 0], sizes = [64, 8], strides = [1, 1]} : vector<64x128xf32> to vector<64x8xf32>
    %c0_35 = arith.constant 0 : index
    %c0_36 = arith.constant 0 : index
    %176 = vector.load %arg3[%c0_35, %c0_36] : memref<64x8xf32, #tpu.memory_space<vmem>>, vector<64x8xf32>
    tpu.vector_store %arg3[%c0_35, %c0_36], %175 {strides = array<i32>} : memref<64x8xf32, #tpu.memory_space<vmem>>, vector<64x8xf32>,
    return
  }
}

</mosaic_0001>

<llo_original>
// kernel: tpu_custom_call.1
$region0: #{tpu_custom_call.1}
  #allocation0 [shape = 'u32[]', space=smem, size = 0x4, offset = 0x4, fixed_abs, tag = 'smem constant byte address 0x4 - core index']
  #allocation1 [shape = 'u32[144,128]{1,0:T(1,128)}', space=vmem, size = 0x12000, scoped, tag = 'internal scratch']
  %s0 = inlined_call_operand.vmem [shape: f32[64,16], index: 0, kind: input, shape index: {}]
  %s1 = inlined_call_operand.vmem [shape: f32[2,8,32], index: 1, kind: input, shape index: {}]
  %s2 = inlined_call_operand.hbm [shape: f32[96,128], index: 2, kind: input, shape index: {}]
  %s3 = inlined_call_operand.vmem [shape: f32[64,8], index: 3, kind: output, shape index: {0}]
  %s4 = inlined_call_operand.hbm [shape: f32[2,8,32], index: 4, kind: output, shape index: {1}]
  %5 = xla_tuple %s3, %s4
  %s6 = sld [smem:[#allocation0]]
  $region34: #{tpu_custom_call.1} parent=0
    _
  %s8 = ssub.s32 1, %s6
  %s9 = scalar_select 0, %s8, %s6
  $region1: #{tpu_custom_call.1} parent=0
    #allocation2 [shape = 'u8[49152]{0}', space=vmem, size = 0xc000, scoped, tag = 'input window, operand 2, single buffered']
    #allocation3 [shape = 's32[1]{0}', space=sflag, size = 0x4, scoped, tag = 'scoped memory for tpu_custom_call.1']
    #allocation4 [shape = 's32[1]{0}', space=sflag, size = 0x4, scoped, tag = 'scoped memory for tpu_custom_call.1']
    #allocation5 [shape = 'u8[8192]{0}', space=vmem, size = 0x2000, scoped, tag = 'output window, operand 1, single buffered']
    %10 = vsyncpa [#allocation3], 0
    %11 = vsyncpa [#allocation4], 0
    // Predicated region
    $region2: #{tpu_custom_call.1} parent=1 // pred_check
      _
    $region3: #{tpu_custom_call.1} parent=1 // pred_check_branch
      %13 = sbr.rel (0) target = $region5
    $region4: #{tpu_custom_call.1} parent=1 // pred_region
      _
    $region5: #{tpu_custom_call.1} parent=1 // pred_fallthru
      _
    // Predicated region
    $region6: #{tpu_custom_call.1} parent=1 // pred_check
      _
    $region7: #{tpu_custom_call.1} parent=1 // pred_check_branch
      %15 = sbr.rel (0) target = $region9
    $region8: #{tpu_custom_call.1} parent=1 // pred_region
      _
    $region9: #{tpu_custom_call.1} parent=1 // pred_fallthru
      _
    // Predicated region
    $region10: #{tpu_custom_call.1} parent=1 // pred_check
      _
    $region11: #{tpu_custom_call.1} parent=1 // pred_check_branch
      %17 = sbr.rel (0) target = $region13
    $region12: #{tpu_custom_call.1} parent=1 // pred_region
      %s19 = ssub.s32 1536, 1536
      %20 = vsyncadd [#allocation3], %s19
      %s21 = sshll.u32 [#allocation2], 4
      %s22 = int_to_ptr.vmem [resolvable:$true] %s21
      %27 = dma.hbm_to_vmem [thread:$0]  %s2, 1536, %s22, [#allocation3], 128, 128, 8
    $region13: #{tpu_custom_call.1} parent=1 // pred_fallthru
      _
    // Predicated region
    $region14: #{tpu_custom_call.1} parent=1 // pred_check
      _
    $region15: #{tpu_custom_call.1} parent=1 // pred_check_branch
      %29 = sbr.rel (0) target = $region17
    $region16: #{tpu_custom_call.1} parent=1 // pred_region
      %30 = dma.done [#allocation3], 1536
    $region17: #{tpu_custom_call.1} parent=1 // pred_fallthru
      _
    %v31 = vld [vmem:[#allocation2] sm:$0xff]
    %v32 = vld [vmem:[#allocation2 + $0x8] sm:$0xff]
    %v33 = vld [vmem:[#allocation2 + $0x10] sm:$0xff]
    %v34 = vld [vmem:[#allocation2 + $0x18] sm:$0xff]
    %v35 = vld [vmem:[#allocation2 + $0x20] sm:$0xff]
    %v36 = vld [vmem:[#allocation2 + $0x28] sm:$0xff]
    %v37 = vld [vmem:[#allocation2 + $0x30] sm:$0x1]
    %v38 = vld [vmem:[#allocation2 + $0x38] sm:$0xff]
    %v39 = vld [vmem:[#allocation2 + $0x40] sm:$0xff]
    %v40 = vld [vmem:[#allocation2 + $0x48] sm:$0xff]
    %v41 = vld [vmem:[#allocation2 + $0x50] sm:$0xff]
    %v42 = vld [vmem:[#allocation2 + $0x58] sm:$0x1]
    %v43 = vld [vmem:[%s0] sm:$0xff]
    %v44 = vld [vmem:[%s0 + $0x8] sm:$0xff]
    %v45 = vld [vmem:[%s0 + $0x10] sm:$0xff]
    %v46 = vld [vmem:[%s0 + $0x18] sm:$0xff]
    %v47 = vld [vmem:[%s0 + $0x20] sm:$0xff]
    %v48 = vld [vmem:[%s0 + $0x28] sm:$0xff]
    %v49 = vld [vmem:[%s0 + $0x30] sm:$0xff]
    %v50 = vld [vmem:[%s0 + $0x38] sm:$0xff]
    %v51 = vlaneseq
    %v52 = vshrl.u32 %v51, 7
    %v53 = vsub.s32 0, %v52
    %v54 = vrot.slane %v37, %v53
    %vm55 = vcmask 130048
    %v57 = vsel %vm55, %v43, 0
    %v60 = vsel %vm55, %v44, 0
    %v63 = vsel %vm55, %v45, 0
    %v66 = vsel %vm55, %v46, 0
    %v69 = vsel %vm55, %v47, 0
    %v72 = vsel %vm55, %v48, 0
    %v75 = vsel %vm55, %v49, 0
    %v78 = vsel %vm55, %v50, 0
    %80 = vmatprep.subr.mxu0 0.0
    %81 = vmatpush1.msra.mxu0 %v31
    %82 = vmatprep.subr.mxu0 0.0
    %83 = vmatpush1.msra.mxu0 %v32
    %84 = vmatprep.subr.mxu0 0.0
    %85 = vmatpush1.msra.mxu0 0.0
    %86 = vmatprep.subr.mxu0 0.0
    %87 = vmatpush1.msra.mxu0 0.0
    %88 = vmatprep.subr.mxu0 0.0
    %89 = vmatpush1.msra.mxu0 0.0
    %90 = vmatprep.subr.mxu0 0.0
    %91 = vmatpush1.msra.mxu0 0.0
    %92 = vmatprep.subr.mxu0 0.0
    %93 = vmatpush1.msra.mxu0 0.0
    %94 = vmatprep.subr.mxu0 0.0
    %95 = vmatpush1.msra.mxu0 0.0
    %96 = vmatprep.subr.mxu0 0.0
    %97 = vmatpush1.msra.mxu0 0.0
    %98 = vmatprep.subr.mxu0 0.0
    %99 = vmatpush1.msra.mxu0 0.0
    %100 = vmatprep.subr.mxu0 0.0
    %101 = vmatpush1.msra.mxu0 0.0
    %102 = vmatprep.subr.mxu0 0.0
    %103 = vmatpush1.msra.mxu0 0.0
    %104 = vmatprep.subr.mxu0 0.0
    %105 = vmatpush1.msra.mxu0 0.0
    %106 = vmatprep.subr.mxu0 0.0
    %107 = vmatpush1.msra.mxu0 0.0
    %108 = vmatprep.subr.mxu0 0.0
    %109 = vmatpush1.msra.mxu0 0.0
    %110 = vmatprep.subr.mxu0 0.0
    %111 = vmatpush1.msra.mxu0 0.0
    %112 = vmatprep.subr.mxu0 0.0
    %113 = vmatpush1.msra.mxu0 0.0
    %114 = vmatprep.subr.mxu0 0.0
    %115 = vmatpush1.msra.mxu0 0.0
    %116 = vmatprep.subr.mxu0 0.0
    %117 = vmatpush1.msra.mxu0 0.0
    %118 = vmatprep.subr.mxu0 0.0
    %119 = vmatpush1.msra.mxu0 0.0
    %120 = vmatprep.subr.mxu0 0.0
    %121 = vmatpush1.msra.mxu0 0.0
    %122 = vmatprep.subr.mxu0 0.0
    %123 = vmatpush1.msra.mxu0 0.0
    %124 = vmatprep.subr.mxu0 0.0
    %125 = vmatpush1.msra.mxu0 0.0
    %126 = vmatprep.subr.mxu0 0.0
    %127 = vmatpush1.msra.mxu0 0.0
    %128 = vmatprep.subr.mxu0 0.0
    %129 = vmatpush1.msra.mxu0 0.0
    %130 = vmatprep.subr.mxu0 0.0
    %131 = vmatpush1.msra.mxu0 0.0
    %132 = vmatprep.subr.mxu0 0.0
    %133 = vmatpush1.msra.mxu0 0.0
    %134 = vmatprep.subr.mxu0 0.0
    %135 = vmatpush1.msra.mxu0 0.0
    %136 = vmatprep.subr.mxu0 0.0
    %137 = vmatpush1.msra.mxu0 0.0
    %138 = vmatprep.subr.mxu0 0.0
    %139 = vmatpush1.msra.mxu0 0.0
    %140 = vmatprep.subr.mxu0 0.0
    %141 = vmatpush1.msra.mxu0 0.0
    %142 = vmatprep.subr.mxu0 0.0
    %143 = vmatpush1.msra.mxu0 0.0
    %144 = vmatprep.mubr.f32.mxu0 0.0
    %145 = vmatmul.mubr.f32.gmra.mrb[0].mxu0 %v57
    %v146 = vpop.f32.mrb[0].mxu0
    %v147 = vadd.f32 %v54, %v146
    %v148 = vpop.f32.mrb[0].mxu0
    %149 = vmatprep.mubr.f32.mxu0 0.0
    %150 = vmatmul.mubr.f32.gmra.mrb[0].mxu0 %v60
    %v151 = vpop.f32.mrb[0].mxu0
    %v152 = vadd.f32 %v54, %v151
    %v153 = vpop.f32.mrb[0].mxu0
    %154 = vmatprep.mubr.f32.mxu0 0.0
    %155 = vmatmul.mubr.f32.gmra.mrb[0].mxu0 %v63
    %v156 = vpop.f32.mrb[0].mxu0
    %v157 = vadd.f32 %v54, %v156
    %v158 = vpop.f32.mrb[0].mxu0
    %159 = vmatprep.mubr.f32.mxu0 0.0
    %160 = vmatmul.mubr.f32.gmra.mrb[0].mxu0 %v66
    %v161 = vpop.f32.mrb[0].mxu0
    %v162 = vadd.f32 %v54, %v161
    %v163 = vpop.f32.mrb[0].mxu0
    %164 = vmatprep.mubr.f32.mxu0 0.0
    %165 = vmatmul.mubr.f32.gmra.mrb[0].mxu0 %v69
    %v166 = vpop.f32.mrb[0].mxu0
    %v167 = vadd.f32 %v54, %v166
    %v168 = vpop.f32.mrb[0].mxu0
    %169 = vmatprep.mubr.f32.mxu0 0.0
    %170 = vmatmul.mubr.f32.gmra.mrb[0].mxu0 %v72
    %v171 = vpop.f32.mrb[0].mxu0
    %v172 = vadd.f32 %v54, %v171
    %v173 = vpop.f32.mrb[0].mxu0
    %174 = vmatprep.mubr.f32.mxu0 0.0
    %175 = vmatmul.mubr.f32.gmra.mrb[0].mxu0 %v75
    %v176 = vpop.f32.mrb[0].mxu0
    %v177 = vadd.f32 %v54, %v176
    %v178 = vpop.f32.mrb[0].mxu0
    %179 = vmatprep.mubr.f32.mxu0 0.0
    %180 = vmatmul.mubr.f32.gmra.mrb[0].mxu0 %v78
    %v181 = vpop.f32.mrb[0].mxu0
    %v182 = vadd.f32 %v54, %v181
    %v183 = vpop.f32.mrb[0].mxu0
    %184 = vdwg.mxu0
    %v185 = vld [vmem:[%s1] sm:$0xff]
    %s186 = scalar_lea.vmem %s1, 8
    %v187 = vld [vmem:[%s186] sm:$0xff]
    %vm188 = vcmask 261120
    %v190 = vsel %vm188, %v185, 0
    %192 = vmatprep.subr.mxu0 0.0
    %193 = vmatpush1.msra.mxu0 %v33
    %194 = vmatprep.subr.mxu0 0.0
    %195 = vmatpush1.msra.mxu0 %v34
    %196 = vmatprep.subr.mxu0 0.0
    %197 = vmatpush1.msra.mxu0 %v35
    %198 = vmatprep.subr.mxu0 0.0
    %199 = vmatpush1.msra.mxu0 %v36
    %200 = vmatprep.subr.mxu0 0.0
    %201 = vmatpush1.msra.mxu0 0.0
    %202 = vmatprep.subr.mxu0 0.0
    %203 = vmatpush1.msra.mxu0 0.0
    %204 = vmatprep.subr.mxu0 0.0
    %205 = vmatpush1.msra.mxu0 0.0
    %206 = vmatprep.subr.mxu0 0.0
    %207 = vmatpush1.msra.mxu0 0.0
    %208 = vmatprep.subr.mxu0 0.0
    %209 = vmatpush1.msra.mxu0 0.0
    %210 = vmatprep.subr.mxu0 0.0
    %211 = vmatpush1.msra.mxu0 0.0
    %212 = vmatprep.subr.mxu0 0.0
    %213 = vmatpush1.msra.mxu0 0.0
    %214 = vmatprep.subr.mxu0 0.0
    %215 = vmatpush1.msra.mxu0 0.0
    %216 = vmatprep.subr.mxu0 0.0
    %217 = vmatpush1.msra.mxu0 0.0
    %218 = vmatprep.subr.mxu0 0.0
    %219 = vmatpush1.msra.mxu0 0.0
    %220 = vmatprep.subr.mxu0 0.0
    %221 = vmatpush1.msra.mxu0 0.0
    %222 = vmatprep.subr.mxu0 0.0
    %223 = vmatpush1.msra.mxu0 0.0
    %224 = vmatprep.subr.mxu0 0.0
    %225 = vmatpush1.msra.mxu0 0.0
    %226 = vmatprep.subr.mxu0 0.0
    %227 = vmatpush1.msra.mxu0 0.0
    %228 = vmatprep.subr.mxu0 0.0
    %229 = vmatpush1.msra.mxu0 0.0
    %230 = vmatprep.subr.mxu0 0.0
    %231 = vmatpush1.msra.mxu0 0.0
    %232 = vmatprep.subr.mxu0 0.0
    %233 = vmatpush1.msra.mxu0 0.0
    %234 = vmatprep.subr.mxu0 0.0
    %235 = vmatpush1.msra.mxu0 0.0
    %236 = vmatprep.subr.mxu0 0.0
    %237 = vmatpush1.msra.mxu0 0.0
    %238 = vmatprep.subr.mxu0 0.0
    %239 = vmatpush1.msra.mxu0 0.0
    %240 = vmatprep.subr.mxu0 0.0
    %241 = vmatpush1.msra.mxu0 0.0
    %242 = vmatprep.subr.mxu0 0.0
    %243 = vmatpush1.msra.mxu0 0.0
    %244 = vmatprep.subr.mxu0 0.0
    %245 = vmatpush1.msra.mxu0 0.0
    %246 = vmatprep.subr.mxu0 0.0
    %247 = vmatpush1.msra.mxu0 0.0
    %248 = vmatprep.subr.mxu0 0.0
    %249 = vmatpush1.msra.mxu0 0.0
    %250 = vmatprep.subr.mxu0 0.0
    %251 = vmatpush1.msra.mxu0 0.0
    %252 = vmatprep.subr.mxu0 0.0
    %253 = vmatpush1.msra.mxu0 0.0
    %254 = vmatprep.subr.mxu0 0.0
    %255 = vmatpush1.msra.mxu0 0.0
    %256 = vmatprep.mubr.f32.mxu0 0.0
    %257 = vmatmul.mubr.f32.gmra.mrb[0].mxu0 %v190
    %v258 = vpop.f32.mrb[0].mxu0
    %v259 = vadd.f32 0.0, %v258
    %v260 = vpop.f32.mrb[0].mxu0
    %261 = vdwg.mxu0
    %v262 = vadd.f32 %v147, %v259
    %v263 = vxor.u32 %v262, 2147483648
    %v264 = vmul.f32 %v263, 1.442695
    %v265 = vpow.pop %v264
    %v266 = vadd.f32 %v265, 1.0
    %v267 = vrcp.pop %v266
    %v268 = vmul.f32 1.0, %v267
    %v269 = vtanh.pop %v262
    %271 = vrot.lane.b32.xlu0 %v187, 32
    %v272 = vpop.permute.xlu0 %271
    %v274 = vmul.f32 %v268, %v272
    %276 = vrot.lane.b32.xlu0 %v269, 32
    %v277 = vpop.permute.xlu0 %276
    %v279 = vmul.f32 %v268, %v277
    %281 = vrot.lane.b32.xlu0 %v279, 32
    %v282 = vpop.permute.xlu0 %281
    %v284 = vadd.f32 %v274, %v282
    %v285 = vtanh.pop %v284
    %287 = vrot.lane.b32.xlu0 %v285, 32
    %v288 = vpop.permute.xlu0 %287
    %v290 = vmul.f32 %v268, %v288
    %292 = vrot.lane.b32.xlu0 %v290, 64
    %v293 = vpop.permute.xlu0 %292
    %v294 = vsel %vm188, %v293, 0
    %296 = vmatprep.subr.mxu0 0.0
    %297 = vmatpush1.msra.mxu0 %v33
    %298 = vmatprep.subr.mxu0 0.0
    %299 = vmatpush1.msra.mxu0 %v34
    %300 = vmatprep.subr.mxu0 0.0
    %301 = vmatpush1.msra.mxu0 %v35
    %302 = vmatprep.subr.mxu0 0.0
    %303 = vmatpush1.msra.mxu0 %v36
    %304 = vmatprep.subr.mxu0 0.0
    %305 = vmatpush1.msra.mxu0 0.0
    %306 = vmatprep.subr.mxu0 0.0
    %307 = vmatpush1.msra.mxu0 0.0
    %308 = vmatprep.subr.mxu0 0.0
    %309 = vmatpush1.msra.mxu0 0.0
    %310 = vmatprep.subr.mxu0 0.0
    %311 = vmatpush1.msra.mxu0 0.0
    %312 = vmatprep.subr.mxu0 0.0
    %313 = vmatpush1.msra.mxu0 0.0
    %314 = vmatprep.subr.mxu0 0.0
    %315 = vmatpush1.msra.mxu0 0.0
    %316 = vmatprep.subr.mxu0 0.0
    %317 = vmatpush1.msra.mxu0 0.0
    %318 = vmatprep.subr.mxu0 0.0
    %319 = vmatpush1.msra.mxu0 0.0
    %320 = vmatprep.subr.mxu0 0.0
    %321 = vmatpush1.msra.mxu0 0.0
    %322 = vmatprep.subr.mxu0 0.0
    %323 = vmatpush1.msra.mxu0 0.0
    %324 = vmatprep.subr.mxu0 0.0
    %325 = vmatpush1.msra.mxu0 0.0
    %326 = vmatprep.subr.mxu0 0.0
    %327 = vmatpush1.msra.mxu0 0.0
    %328 = vmatprep.subr.mxu0 0.0
    %329 = vmatpush1.msra.mxu0 0.0
    %330 = vmatprep.subr.mxu0 0.0
    %331 = vmatpush1.msra.mxu0 0.0
    %332 = vmatprep.subr.mxu0 0.0
    %333 = vmatpush1.msra.mxu0 0.0
    %334 = vmatprep.subr.mxu0 0.0
    %335 = vmatpush1.msra.mxu0 0.0
    %336 = vmatprep.subr.mxu0 0.0
    %337 = vmatpush1.msra.mxu0 0.0
    %338 = vmatprep.subr.mxu0 0.0
    %339 = vmatpush1.msra.mxu0 0.0
    %340 = vmatprep.subr.mxu0 0.0
    %341 = vmatpush1.msra.mxu0 0.0
    %342 = vmatprep.subr.mxu0 0.0
    %343 = vmatpush1.msra.mxu0 0.0
    %344 = vmatprep.subr.mxu0 0.0
    %345 = vmatpush1.msra.mxu0 0.0
    %346 = vmatprep.subr.mxu0 0.0
    %347 = vmatpush1.msra.mxu0 0.0
    %348 = vmatprep.subr.mxu0 0.0
    %349 = vmatpush1.msra.mxu0 0.0
    %350 = vmatprep.subr.mxu0 0.0
    %351 = vmatpush1.msra.mxu0 0.0
    %352 = vmatprep.subr.mxu0 0.0
    %353 = vmatpush1.msra.mxu0 0.0
    %354 = vmatprep.subr.mxu0 0.0
    %355 = vmatpush1.msra.mxu0 0.0
    %356 = vmatprep.subr.mxu0 0.0
    %357 = vmatpush1.msra.mxu0 0.0
    %358 = vmatprep.subr.mxu0 0.0
    %359 = vmatpush1.msra.mxu0 0.0
    %360 = vmatprep.mubr.f32.mxu0 0.0
    %361 = vmatmul.mubr.f32.gmra.mrb[0].mxu0 %v294
    %v362 = vpop.f32.mrb[0].mxu0
    %v363 = vadd.f32 0.0, %v362
    %v364 = vpop.f32.mrb[0].mxu0
    %365 = vdwg.mxu0
    %v366 = vadd.f32 %v152, %v363
    %v367 = vxor.u32 %v366, 2147483648
    %v368 = vmul.f32 %v367, 1.442695
    %v369 = vpow.pop %v368
    %v370 = vadd.f32 %v369, 1.0
    %v371 = vrcp.pop %v370
    %v372 = vmul.f32 1.0, %v371
    %v373 = vtanh.pop %v366
    %v374 = vmul.f32 %v372, %v284
    %376 = vrot.lane.b32.xlu0 %v373, 32
    %v377 = vpop.permute.xlu0 %376
    %v379 = vmul.f32 %v372, %v377
    %381 = vrot.lane.b32.xlu0 %v379, 32
    %v382 = vpop.permute.xlu0 %381
    %v384 = vadd.f32 %v374, %v382
    %v385 = vtanh.pop %v384
    %387 = vrot.lane.b32.xlu0 %v385, 32
    %v388 = vpop.permute.xlu0 %387
    %v390 = vmul.f32 %v372, %v388
    %392 = vrot.lane.b32.xlu0 %v390, 64
    %v393 = vpop.permute.xlu0 %392
    %v394 = vsel %vm188, %v393, 0
    %396 = vmatprep.subr.mxu0 0.0
    %397 = vmatpush1.msra.mxu0 %v33
    %398 = vmatprep.subr.mxu0 0.0
    %399 = vmatpush1.msra.mxu0 %v34
    %400 = vmatprep.subr.mxu0 0.0
    %401 = vmatpush1.msra.mxu0 %v35
    %402 = vmatprep.subr.mxu0 0.0
    %403 = vmatpush1.msra.mxu0 %v36
    %404 = vmatprep.subr.mxu0 0.0
    %405 = vmatpush1.msra.mxu0 0.0
    %406 = vmatprep.subr.mxu0 0.0
    %407 = vmatpush1.msra.mxu0 0.0
    %408 = vmatprep.subr.mxu0 0.0
    %409 = vmatpush1.msra.mxu0 0.0
    %410 = vmatprep.subr.mxu0 0.0
    %411 = vmatpush1.msra.mxu0 0.0
    %412 = vmatprep.subr.mxu0 0.0
    %413 = vmatpush1.msra.mxu0 0.0
    %414 = vmatprep.subr.mxu0 0.0
    %415 = vmatpush1.msra.mxu0 0.0
    %416 = vmatprep.subr.mxu0 0.0
    %417 = vmatpush1.msra.mxu0 0.0
    %418 = vmatprep.subr.mxu0 0.0
    %419 = vmatpush1.msra.mxu0 0.0
    %420 = vmatprep.subr.mxu0 0.0
    %421 = vmatpush1.msra.mxu0 0.0
    %422 = vmatprep.subr.mxu0 0.0
    %423 = vmatpush1.msra.mxu0 0.0
    %424 = vmatprep.subr.mxu0 0.0
    %425 = vmatpush1.msra.mxu0 0.0
    %426 = vmatprep.subr.mxu0 0.0
    %427 = vmatpush1.msra.mxu0 0.0
    %428 = vmatprep.subr.mxu0 0.0
    %429 = vmatpush1.msra.mxu0 0.0
    %430 = vmatprep.subr.mxu0 0.0
    %431 = vmatpush1.msra.mxu0 0.0
    %432 = vmatprep.subr.mxu0 0.0
    %433 = vmatpush1.msra.mxu0 0.0
    %434 = vmatprep.subr.mxu0 0.0
    %435 = vmatpush1.msra.mxu0 0.0
    %436 = vmatprep.subr.mxu0 0.0
    %437 = vmatpush1.msra.mxu0 0.0
    %438 = vmatprep.subr.mxu0 0.0
    %439 = vmatpush1.msra.mxu0 0.0
    %440 = vmatprep.subr.mxu0 0.0
    %441 = vmatpush1.msra.mxu0 0.0
    %442 = vmatprep.subr.mxu0 0.0
    %443 = vmatpush1.msra.mxu0 0.0
    %444 = vmatprep.subr.mxu0 0.0
    %445 = vmatpush1.msra.mxu0 0.0
    %446 = vmatprep.subr.mxu0 0.0
    %447 = vmatpush1.msra.mxu0 0.0
    %448 = vmatprep.subr.mxu0 0.0
    %449 = vmatpush1.msra.mxu0 0.0
    %450 = vmatprep.subr.mxu0 0.0
    %451 = vmatpush1.msra.mxu0 0.0
    %452 = vmatprep.subr.mxu0 0.0
    %453 = vmatpush1.msra.mxu0 0.0
    %454 = vmatprep.subr.mxu0 0.0
    %455 = vmatpush1.msra.mxu0 0.0
    %456 = vmatprep.subr.mxu0 0.0
    %457 = vmatpush1.msra.mxu0 0.0
    %458 = vmatprep.subr.mxu0 0.0
    %459 = vmatpush1.msra.mxu0 0.0
    %460 = vmatprep.mubr.f32.mxu0 0.0
    %461 = vmatmul.mubr.f32.gmra.mrb[0].mxu0 %v394
    %v462 = vpop.f32.mrb[0].mxu0
    %v463 = vadd.f32 0.0, %v462
    %v464 = vpop.f32.mrb[0].mxu0
    %465 = vdwg.mxu0
    %v466 = vadd.f32 %v157, %v463
    %v467 = vxor.u32 %v466, 2147483648
    %v468 = vmul.f32 %v467, 1.442695
    %v469 = vpow.pop %v468
    %v470 = vadd.f32 %v469, 1.0
    %v471 = vrcp.pop %v470
    %v472 = vmul.f32 1.0, %v471
    %v473 = vtanh.pop %v466
    %v474 = vmul.f32 %v472, %v384
    %476 = vrot.lane.b32.xlu0 %v473, 32
    %v477 = vpop.permute.xlu0 %476
    %v479 = vmul.f32 %v472, %v477
    %481 = vrot.lane.b32.xlu0 %v479, 32
    %v482 = vpop.permute.xlu0 %481
    %v484 = vadd.f32 %v474, %v482
    %v485 = vtanh.pop %v484
    %487 = vrot.lane.b32.xlu0 %v485, 32
    %v488 = vpop.permute.xlu0 %487
    %v490 = vmul.f32 %v472, %v488
    %492 = vrot.lane.b32.xlu0 %v490, 64
    %v493 = vpop.permute.xlu0 %492
    %v494 = vsel %vm188, %v493, 0
    %496 = vmatprep.subr.mxu0 0.0
    %497 = vmatpush1.msra.mxu0 %v33
    %498 = vmatprep.subr.mxu0 0.0
    %499 = vmatpush1.msra.mxu0 %v34
    %500 = vmatprep.subr.mxu0 0.0
    %501 = vmatpush1.msra.mxu0 %v35
    %502 = vmatprep.subr.mxu0 0.0
    %503 = vmatpush1.msra.mxu0 %v36
    %504 = vmatprep.subr.mxu0 0.0
    %505 = vmatpush1.msra.mxu0 0.0
    %506 = vmatprep.subr.mxu0 0.0
    %507 = vmatpush1.msra.mxu0 0.0
    %508 = vmatprep.subr.mxu0 0.0
    %509 = vmatpush1.msra.mxu0 0.0
    %510 = vmatprep.subr.mxu0 0.0
    %511 = vmatpush1.msra.mxu0 0.0
    %512 = vmatprep.subr.mxu0 0.0
    %513 = vmatpush1.msra.mxu0 0.0
    %514 = vmatprep.subr.mxu0 0.0
    %515 = vmatpush1.msra.mxu0 0.0
    %516 = vmatprep.subr.mxu0 0.0
    %517 = vmatpush1.msra.mxu0 0.0
    %518 = vmatprep.subr.mxu0 0.0
    %519 = vmatpush1.msra.mxu0 0.0
    %520 = vmatprep.subr.mxu0 0.0
    %521 = vmatpush1.msra.mxu0 0.0
    %522 = vmatprep.subr.mxu0 0.0
    %523 = vmatpush1.msra.mxu0 0.0
    %524 = vmatprep.subr.mxu0 0.0
    %525 = vmatpush1.msra.mxu0 0.0
    %526 = vmatprep.subr.mxu0 0.0
    %527 = vmatpush1.msra.mxu0 0.0
    %528 = vmatprep.subr.mxu0 0.0
    %529 = vmatpush1.msra.mxu0 0.0
    %530 = vmatprep.subr.mxu0 0.0
    %531 = vmatpush1.msra.mxu0 0.0
    %532 = vmatprep.subr.mxu0 0.0
    %533 = vmatpush1.msra.mxu0 0.0
    %534 = vmatprep.subr.mxu0 0.0
    %535 = vmatpush1.msra.mxu0 0.0
    %536 = vmatprep.subr.mxu0 0.0
    %537 = vmatpush1.msra.mxu0 0.0
    %538 = vmatprep.subr.mxu0 0.0
    %539 = vmatpush1.msra.mxu0 0.0
    %540 = vmatprep.subr.mxu0 0.0
    %541 = vmatpush1.msra.mxu0 0.0
    %542 = vmatprep.subr.mxu0 0.0
    %543 = vmatpush1.msra.mxu0 0.0
    %544 = vmatprep.subr.mxu0 0.0
    %545 = vmatpush1.msra.mxu0 0.0
    %546 = vmatprep.subr.mxu0 0.0
    %547 = vmatpush1.msra.mxu0 0.0
    %548 = vmatprep.subr.mxu0 0.0
    %549 = vmatpush1.msra.mxu0 0.0
    %550 = vmatprep.subr.mxu0 0.0
    %551 = vmatpush1.msra.mxu0 0.0
    %552 = vmatprep.subr.mxu0 0.0
    %553 = vmatpush1.msra.mxu0 0.0
    %554 = vmatprep.subr.mxu0 0.0
    %555 = vmatpush1.msra.mxu0 0.0
    %556 = vmatprep.subr.mxu0 0.0
    %557 = vmatpush1.msra.mxu0 0.0
    %558 = vmatprep.subr.mxu0 0.0
    %559 = vmatpush1.msra.mxu0 0.0
    %560 = vmatprep.mubr.f32.mxu0 0.0
    %561 = vmatmul.mubr.f32.gmra.mrb[0].mxu0 %v494
    %v562 = vpop.f32.mrb[0].mxu0
    %v563 = vadd.f32 0.0, %v562
    %v564 = vpop.f32.mrb[0].mxu0
    %565 = vdwg.mxu0
    %v566 = vadd.f32 %v162, %v563
    %v567 = vxor.u32 %v566, 2147483648
    %v568 = vmul.f32 %v567, 1.442695
    %v569 = vpow.pop %v568
    %v570 = vadd.f32 %v569, 1.0
    %v571 = vrcp.pop %v570
    %v572 = vmul.f32 1.0, %v571
    %v573 = vtanh.pop %v566
    %v574 = vmul.f32 %v572, %v484
    %576 = vrot.lane.b32.xlu0 %v573, 32
    %v577 = vpop.permute.xlu0 %576
    %v579 = vmul.f32 %v572, %v577
    %581 = vrot.lane.b32.xlu0 %v579, 32
    %v582 = vpop.permute.xlu0 %581
    %v584 = vadd.f32 %v574, %v582
    %v585 = vtanh.pop %v584
    %587 = vrot.lane.b32.xlu0 %v585, 32
    %v588 = vpop.permute.xlu0 %587
    %v590 = vmul.f32 %v572, %v588
    %592 = vrot.lane.b32.xlu0 %v590, 64
    %v593 = vpop.permute.xlu0 %592
    %v594 = vsel %vm188, %v593, 0
    %596 = vmatprep.subr.mxu0 0.0
    %597 = vmatpush1.msra.mxu0 %v33
    %598 = vmatprep.subr.mxu0 0.0
    %599 = vmatpush1.msra.mxu0 %v34
    %600 = vmatprep.subr.mxu0 0.0
    %601 = vmatpush1.msra.mxu0 %v35
    %602 = vmatprep.subr.mxu0 0.0
    %603 = vmatpush1.msra.mxu0 %v36
    %604 = vmatprep.subr.mxu0 0.0
    %605 = vmatpush1.msra.mxu0 0.0
    %606 = vmatprep.subr.mxu0 0.0
    %607 = vmatpush1.msra.mxu0 0.0
    %608 = vmatprep.subr.mxu0 0.0
    %609 = vmatpush1.msra.mxu0 0.0
    %610 = vmatprep.subr.mxu0 0.0
    %611 = vmatpush1.msra.mxu0 0.0
    %612 = vmatprep.subr.mxu0 0.0
    %613 = vmatpush1.msra.mxu0 0.0
    %614 = vmatprep.subr.mxu0 0.0
    %615 = vmatpush1.msra.mxu0 0.0
    %616 = vmatprep.subr.mxu0 0.0
    %617 = vmatpush1.msra.mxu0 0.0
    %618 = vmatprep.subr.mxu0 0.0
    %619 = vmatpush1.msra.mxu0 0.0
    %620 = vmatprep.subr.mxu0 0.0
    %621 = vmatpush1.msra.mxu0 0.0
    %622 = vmatprep.subr.mxu0 0.0
    %623 = vmatpush1.msra.mxu0 0.0
    %624 = vmatprep.subr.mxu0 0.0
    %625 = vmatpush1.msra.mxu0 0.0
    %626 = vmatprep.subr.mxu0 0.0
    %627 = vmatpush1.msra.mxu0 0.0
    %628 = vmatprep.subr.mxu0 0.0
    %629 = vmatpush1.msra.mxu0 0.0
    %630 = vmatprep.subr.mxu0 0.0
    %631 = vmatpush1.msra.mxu0 0.0
    %632 = vmatprep.subr.mxu0 0.0
    %633 = vmatpush1.msra.mxu0 0.0
    %634 = vmatprep.subr.mxu0 0.0
    %635 = vmatpush1.msra.mxu0 0.0
    %636 = vmatprep.subr.mxu0 0.0
    %637 = vmatpush1.msra.mxu0 0.0
    %638 = vmatprep.subr.mxu0 0.0
    %639 = vmatpush1.msra.mxu0 0.0
    %640 = vmatprep.subr.mxu0 0.0
    %641 = vmatpush1.msra.mxu0 0.0
    %642 = vmatprep.subr.mxu0 0.0
    %643 = vmatpush1.msra.mxu0 0.0
    %644 = vmatprep.subr.mxu0 0.0
    %645 = vmatpush1.msra.mxu0 0.0
    %646 = vmatprep.subr.mxu0 0.0
    %647 = vmatpush1.msra.mxu0 0.0
    %648 = vmatprep.subr.mxu0 0.0
    %649 = vmatpush1.msra.mxu0 0.0
    %650 = vmatprep.subr.mxu0 0.0
    %651 = vmatpush1.msra.mxu0 0.0
    %652 = vmatprep.subr.mxu0 0.0
    %653 = vmatpush1.msra.mxu0 0.0
    %654 = vmatprep.subr.mxu0 0.0
    %655 = vmatpush1.msra.mxu0 0.0
    %656 = vmatprep.subr.mxu0 0.0
    %657 = vmatpush1.msra.mxu0 0.0
    %658 = vmatprep.subr.mxu0 0.0
    %659 = vmatpush1.msra.mxu0 0.0
    %660 = vmatprep.mubr.f32.mxu0 0.0
    %661 = vmatmul.mubr.f32.gmra.mrb[0].mxu0 %v594
    %v662 = vpop.f32.mrb[0].mxu0
    %v663 = vadd.f32 0.0, %v662
    %v664 = vpop.f32.mrb[0].mxu0
    %665 = vdwg.mxu0
    %v666 = vadd.f32 %v167, %v663
    %v667 = vxor.u32 %v666, 2147483648
    %v668 = vmul.f32 %v667, 1.442695
    %v669 = vpow.pop %v668
    %v670 = vadd.f32 %v669, 1.0
    %v671 = vrcp.pop %v670
    %v672 = vmul.f32 1.0, %v671
    %v673 = vtanh.pop %v666
    %v674 = vmul.f32 %v672, %v584
    %676 = vrot.lane.b32.xlu0 %v673, 32
    %v677 = vpop.permute.xlu0 %676
    %v679 = vmul.f32 %v672, %v677
    %681 = vrot.lane.b32.xlu0 %v679, 32
    %v682 = vpop.permute.xlu0 %681
    %v684 = vadd.f32 %v674, %v682
    %v685 = vtanh.pop %v684
    %687 = vrot.lane.b32.xlu0 %v685, 32
    %v688 = vpop.permute.xlu0 %687
    %v690 = vmul.f32 %v672, %v688
    %692 = vrot.lane.b32.xlu0 %v690, 64
    %v693 = vpop.permute.xlu0 %692
    %v694 = vsel %vm188, %v693, 0
    %696 = vmatprep.subr.mxu0 0.0
    %697 = vmatpush1.msra.mxu0 %v33
    %698 = vmatprep.subr.mxu0 0.0
    %699 = vmatpush1.msra.mxu0 %v34
    %700 = vmatprep.subr.mxu0 0.0
    %701 = vmatpush1.msra.mxu0 %v35
    %702 = vmatprep.subr.mxu0 0.0
    %703 = vmatpush1.msra.mxu0 %v36
    %704 = vmatprep.subr.mxu0 0.0
    %705 = vmatpush1.msra.mxu0 0.0
    %706 = vmatprep.subr.mxu0 0.0
    %707 = vmatpush1.msra.mxu0 0.0
    %708 = vmatprep.subr.mxu0 0.0
    %709 = vmatpush1.msra.mxu0 0.0
    %710 = vmatprep.subr.mxu0 0.0
    %711 = vmatpush1.msra.mxu0 0.0
    %712 = vmatprep.subr.mxu0 0.0
    %713 = vmatpush1.msra.mxu0 0.0
    %714 = vmatprep.subr.mxu0 0.0
    %715 = vmatpush1.msra.mxu0 0.0
    %716 = vmatprep.subr.mxu0 0.0
    %717 = vmatpush1.msra.mxu0 0.0
    %718 = vmatprep.subr.mxu0 0.0
    %719 = vmatpush1.msra.mxu0 0.0
    %720 = vmatprep.subr.mxu0 0.0
    %721 = vmatpush1.msra.mxu0 0.0
    %722 = vmatprep.subr.mxu0 0.0
    %723 = vmatpush1.msra.mxu0 0.0
    %724 = vmatprep.subr.mxu0 0.0
    %725 = vmatpush1.msra.mxu0 0.0
    %726 = vmatprep.subr.mxu0 0.0
    %727 = vmatpush1.msra.mxu0 0.0
    %728 = vmatprep.subr.mxu0 0.0
    %729 = vmatpush1.msra.mxu0 0.0
    %730 = vmatprep.subr.mxu0 0.0
    %731 = vmatpush1.msra.mxu0 0.0
    %732 = vmatprep.subr.mxu0 0.0
    %733 = vmatpush1.msra.mxu0 0.0
    %734 = vmatprep.subr.mxu0 0.0
    %735 = vmatpush1.msra.mxu0 0.0
    %736 = vmatprep.subr.mxu0 0.0
    %737 = vmatpush1.msra.mxu0 0.0
    %738 = vmatprep.subr.mxu0 0.0
    %739 = vmatpush1.msra.mxu0 0.0
    %740 = vmatprep.subr.mxu0 0.0
    %741 = vmatpush1.msra.mxu0 0.0
    %742 = vmatprep.subr.mxu0 0.0
    %743 = vmatpush1.msra.mxu0 0.0
    %744 = vmatprep.subr.mxu0 0.0
    %745 = vmatpush1.msra.mxu0 0.0
    %746 = vmatprep.subr.mxu0 0.0
    %747 = vmatpush1.msra.mxu0 0.0
    %748 = vmatprep.subr.mxu0 0.0
    %749 = vmatpush1.msra.mxu0 0.0
    %750 = vmatprep.subr.mxu0 0.0
    %751 = vmatpush1.msra.mxu0 0.0
    %752 = vmatprep.subr.mxu0 0.0
    %753 = vmatpush1.msra.mxu0 0.0
    %754 = vmatprep.subr.mxu0 0.0
    %755 = vmatpush1.msra.mxu0 0.0
    %756 = vmatprep.subr.mxu0 0.0
    %757 = vmatpush1.msra.mxu0 0.0
    %758 = vmatprep.subr.mxu0 0.0
    %759 = vmatpush1.msra.mxu0 0.0
    %760 = vmatprep.mubr.f32.mxu0 0.0
    %761 = vmatmul.mubr.f32.gmra.mrb[0].mxu0 %v694
    %v762 = vpop.f32.mrb[0].mxu0
    %v763 = vadd.f32 0.0, %v762
    %v764 = vpop.f32.mrb[0].mxu0
    %765 = vdwg.mxu0
    %v766 = vadd.f32 %v172, %v763
    %v767 = vxor.u32 %v766, 2147483648
    %v768 = vmul.f32 %v767, 1.442695
    %v769 = vpow.pop %v768
    %v770 = vadd.f32 %v769, 1.0
    %v771 = vrcp.pop %v770
    %v772 = vmul.f32 1.0, %v771
    %v773 = vtanh.pop %v766
    %v774 = vmul.f32 %v772, %v684
    %776 = vrot.lane.b32.xlu0 %v773, 32
    %v777 = vpop.permute.xlu0 %776
    %v779 = vmul.f32 %v772, %v777
    %781 = vrot.lane.b32.xlu0 %v779, 32
    %v782 = vpop.permute.xlu0 %781
    %v784 = vadd.f32 %v774, %v782
    %v785 = vtanh.pop %v784
    %787 = vrot.lane.b32.xlu0 %v785, 32
    %v788 = vpop.permute.xlu0 %787
    %v790 = vmul.f32 %v772, %v788
    %792 = vrot.lane.b32.xlu0 %v790, 64
    %v793 = vpop.permute.xlu0 %792
    %v794 = vsel %vm188, %v793, 0
    %796 = vmatprep.subr.mxu0 0.0
    %797 = vmatpush1.msra.mxu0 %v33
    %798 = vmatprep.subr.mxu0 0.0
    %799 = vmatpush1.msra.mxu0 %v34
    %800 = vmatprep.subr.mxu0 0.0
    %801 = vmatpush1.msra.mxu0 %v35
    %802 = vmatprep.subr.mxu0 0.0
    %803 = vmatpush1.msra.mxu0 %v36
    %804 = vmatprep.subr.mxu0 0.0
    %805 = vmatpush1.msra.mxu0 0.0
    %806 = vmatprep.subr.mxu0 0.0
    %807 = vmatpush1.msra.mxu0 0.0
    %808 = vmatprep.subr.mxu0 0.0
    %809 = vmatpush1.msra.mxu0 0.0
    %810 = vmatprep.subr.mxu0 0.0
    %811 = vmatpush1.msra.mxu0 0.0
    %812 = vmatprep.subr.mxu0 0.0
    %813 = vmatpush1.msra.mxu0 0.0
    %814 = vmatprep.subr.mxu0 0.0
    %815 = vmatpush1.msra.mxu0 0.0
    %816 = vmatprep.subr.mxu0 0.0
    %817 = vmatpush1.msra.mxu0 0.0
    %818 = vmatprep.subr.mxu0 0.0
    %819 = vmatpush1.msra.mxu0 0.0
    %820 = vmatprep.subr.mxu0 0.0
    %821 = vmatpush1.msra.mxu0 0.0
    %822 = vmatprep.subr.mxu0 0.0
    %823 = vmatpush1.msra.mxu0 0.0
    %824 = vmatprep.subr.mxu0 0.0
    %825 = vmatpush1.msra.mxu0 0.0
    %826 = vmatprep.subr.mxu0 0.0
    %827 = vmatpush1.msra.mxu0 0.0
    %828 = vmatprep.subr.mxu0 0.0
    %829 = vmatpush1.msra.mxu0 0.0
    %830 = vmatprep.subr.mxu0 0.0
    %831 = vmatpush1.msra.mxu0 0.0
    %832 = vmatprep.subr.mxu0 0.0
    %833 = vmatpush1.msra.mxu0 0.0
    %834 = vmatprep.subr.mxu0 0.0
    %835 = vmatpush1.msra.mxu0 0.0
    %836 = vmatprep.subr.mxu0 0.0
    %837 = vmatpush1.msra.mxu0 0.0
    %838 = vmatprep.subr.mxu0 0.0
    %839 = vmatpush1.msra.mxu0 0.0
    %840 = vmatprep.subr.mxu0 0.0
    %841 = vmatpush1.msra.mxu0 0.0
    %842 = vmatprep.subr.mxu0 0.0
    %843 = vmatpush1.msra.mxu0 0.0
    %844 = vmatprep.subr.mxu0 0.0
    %845 = vmatpush1.msra.mxu0 0.0
    %846 = vmatprep.subr.mxu0 0.0
    %847 = vmatpush1.msra.mxu0 0.0
    %848 = vmatprep.subr.mxu0 0.0
    %849 = vmatpush1.msra.mxu0 0.0
    %850 = vmatprep.subr.mxu0 0.0
    %851 = vmatpush1.msra.mxu0 0.0
    %852 = vmatprep.subr.mxu0 0.0
    %853 = vmatpush1.msra.mxu0 0.0
    %854 = vmatprep.subr.mxu0 0.0
    %855 = vmatpush1.msra.mxu0 0.0
    %856 = vmatprep.subr.mxu0 0.0
    %857 = vmatpush1.msra.mxu0 0.0
    %858 = vmatprep.subr.mxu0 0.0
    %859 = vmatpush1.msra.mxu0 0.0
    %860 = vmatprep.mubr.f32.mxu0 0.0
    %861 = vmatmul.mubr.f32.gmra.mrb[0].mxu0 %v794
    %v862 = vpop.f32.mrb[0].mxu0
    %v863 = vadd.f32 0.0, %v862
    %v864 = vpop.f32.mrb[0].mxu0
    %865 = vdwg.mxu0
    %v866 = vadd.f32 %v177, %v863
    %v867 = vxor.u32 %v866, 2147483648
    %v868 = vmul.f32 %v867, 1.442695
    %v869 = vpow.pop %v868
    %v870 = vadd.f32 %v869, 1.0
    %v871 = vrcp.pop %v870
    %v872 = vmul.f32 1.0, %v871
    %v873 = vtanh.pop %v866
    %v874 = vmul.f32 %v872, %v784
    %876 = vrot.lane.b32.xlu0 %v873, 32
    %v877 = vpop.permute.xlu0 %876
    %v879 = vmul.f32 %v872, %v877
    %881 = vrot.lane.b32.xlu0 %v879, 32
    %v882 = vpop.permute.xlu0 %881
    %v884 = vadd.f32 %v874, %v882
    %v885 = vtanh.pop %v884
    %887 = vrot.lane.b32.xlu0 %v885, 32
    %v888 = vpop.permute.xlu0 %887
    %v890 = vmul.f32 %v872, %v888
    %892 = vrot.lane.b32.xlu0 %v890, 64
    %v893 = vpop.permute.xlu0 %892
    %v894 = vsel %vm188, %v893, 0
    %896 = vmatprep.subr.mxu0 0.0
    %897 = vmatpush1.msra.mxu0 %v33
    %898 = vmatprep.subr.mxu0 0.0
    %899 = vmatpush1.msra.mxu0 %v34
    %900 = vmatprep.subr.mxu0 0.0
    %901 = vmatpush1.msra.mxu0 %v35
    %902 = vmatprep.subr.mxu0 0.0
    %903 = vmatpush1.msra.mxu0 %v36
    %904 = vmatprep.subr.mxu0 0.0
    %905 = vmatpush1.msra.mxu0 0.0
    %906 = vmatprep.subr.mxu0 0.0
    %907 = vmatpush1.msra.mxu0 0.0
    %908 = vmatprep.subr.mxu0 0.0
    %909 = vmatpush1.msra.mxu0 0.0
    %910 = vmatprep.subr.mxu0 0.0
    %911 = vmatpush1.msra.mxu0 0.0
    %912 = vmatprep.subr.mxu0 0.0
    %913 = vmatpush1.msra.mxu0 0.0
    %914 = vmatprep.subr.mxu0 0.0
    %915 = vmatpush1.msra.mxu0 0.0
    %916 = vmatprep.subr.mxu0 0.0
    %917 = vmatpush1.msra.mxu0 0.0
    %918 = vmatprep.subr.mxu0 0.0
    %919 = vmatpush1.msra.mxu0 0.0
    %920 = vmatprep.subr.mxu0 0.0
    %921 = vmatpush1.msra.mxu0 0.0
    %922 = vmatprep.subr.mxu0 0.0
    %923 = vmatpush1.msra.mxu0 0.0
    %924 = vmatprep.subr.mxu0 0.0
    %925 = vmatpush1.msra.mxu0 0.0
    %926 = vmatprep.subr.mxu0 0.0
    %927 = vmatpush1.msra.mxu0 0.0
    %928 = vmatprep.subr.mxu0 0.0
    %929 = vmatpush1.msra.mxu0 0.0
    %930 = vmatprep.subr.mxu0 0.0
    %931 = vmatpush1.msra.mxu0 0.0
    %932 = vmatprep.subr.mxu0 0.0
    %933 = vmatpush1.msra.mxu0 0.0
    %934 = vmatprep.subr.mxu0 0.0
    %935 = vmatpush1.msra.mxu0 0.0
    %936 = vmatprep.subr.mxu0 0.0
    %937 = vmatpush1.msra.mxu0 0.0
    %938 = vmatprep.subr.mxu0 0.0
    %939 = vmatpush1.msra.mxu0 0.0
    %940 = vmatprep.subr.mxu0 0.0
    %941 = vmatpush1.msra.mxu0 0.0
    %942 = vmatprep.subr.mxu0 0.0
    %943 = vmatpush1.msra.mxu0 0.0
    %944 = vmatprep.subr.mxu0 0.0
    %945 = vmatpush1.msra.mxu0 0.0
    %946 = vmatprep.subr.mxu0 0.0
    %947 = vmatpush1.msra.mxu0 0.0
    %948 = vmatprep.subr.mxu0 0.0
    %949 = vmatpush1.msra.mxu0 0.0
    %950 = vmatprep.subr.mxu0 0.0
    %951 = vmatpush1.msra.mxu0 0.0
    %952 = vmatprep.subr.mxu0 0.0
    %953 = vmatpush1.msra.mxu0 0.0
    %954 = vmatprep.subr.mxu0 0.0
    %955 = vmatpush1.msra.mxu0 0.0
    %956 = vmatprep.subr.mxu0 0.0
    %957 = vmatpush1.msra.mxu0 0.0
    %958 = vmatprep.subr.mxu0 0.0
    %959 = vmatpush1.msra.mxu0 0.0
    %960 = vmatprep.mubr.f32.mxu0 0.0
    %961 = vmatmul.mubr.f32.gmra.mrb[0].mxu0 %v894
    %v962 = vpop.f32.mrb[0].mxu0
    %v963 = vadd.f32 0.0, %v962
    %v964 = vpop.f32.mrb[0].mxu0
    %965 = vdwg.mxu0
    %v966 = vadd.f32 %v182, %v963
    %v967 = vxor.u32 %v966, 2147483648
    %v968 = vmul.f32 %v967, 1.442695
    %v969 = vpow.pop %v968
    %v970 = vadd.f32 %v969, 1.0
    %v971 = vrcp.pop %v970
    %v972 = vmul.f32 1.0, %v971
    %v973 = vtanh.pop %v966
    %v974 = vmul.f32 %v972, %v884
    %976 = vrot.lane.b32.xlu0 %v973, 32
    %v977 = vpop.permute.xlu0 %976
    %v979 = vmul.f32 %v972, %v977
    %981 = vrot.lane.b32.xlu0 %v979, 32
    %v982 = vpop.permute.xlu0 %981
    %v984 = vadd.f32 %v974, %v982
    %v985 = vtanh.pop %v984
    %987 = vrot.lane.b32.xlu0 %v985, 32
    %v988 = vpop.permute.xlu0 %987
    %v990 = vmul.f32 %v972, %v988
    %992 = vrot.lane.b32.xlu0 %v990, 64
    %v993 = vpop.permute.xlu0 %992
    %995 = vst.msk [vmem:[#allocation5] sm:$0xff] %vm188, %v993
    %997 = vrot.lane.b32.xlu0 %v984, 96
    %v998 = vpop.permute.xlu0 %997
    %s1000 = scalar_lea.vmem [#allocation5], 8
    %1001 = vst.msk [vmem:[%s1000] sm:$0xff] %vm188, %v998
    %v1002 = vlaneseq
    %v1003 = vshrl.u32 %v1002, 7
    %v1004 = vsub.s32 0, %v1003
    %v1005 = vrot.slane %v42, %v1004
    %v1006 = vsel %vm188, %v993, 0
    %1008 = vmatprep.subr.mxu0 0.0
    %1009 = vmatpush1.msra.mxu0 %v38
    %1010 = vmatprep.subr.mxu0 0.0
    %1011 = vmatpush1.msra.mxu0 %v39
    %1012 = vmatprep.subr.mxu0 0.0
    %1013 = vmatpush1.msra.mxu0 %v40
    %1014 = vmatprep.subr.mxu0 0.0
    %1015 = vmatpush1.msra.mxu0 %v41
    %1016 = vmatprep.subr.mxu0 0.0
    %1017 = vmatpush1.msra.mxu0 0.0
    %1018 = vmatprep.subr.mxu0 0.0
    %1019 = vmatpush1.msra.mxu0 0.0
    %1020 = vmatprep.subr.mxu0 0.0
    %1021 = vmatpush1.msra.mxu0 0.0
    %1022 = vmatprep.subr.mxu0 0.0
    %1023 = vmatpush1.msra.mxu0 0.0
    %1024 = vmatprep.subr.mxu0 0.0
    %1025 = vmatpush1.msra.mxu0 0.0
    %1026 = vmatprep.subr.mxu0 0.0
    %1027 = vmatpush1.msra.mxu0 0.0
    %1028 = vmatprep.subr.mxu0 0.0
    %1029 = vmatpush1.msra.mxu0 0.0
    %1030 = vmatprep.subr.mxu0 0.0
    %1031 = vmatpush1.msra.mxu0 0.0
    %1032 = vmatprep.subr.mxu0 0.0
    %1033 = vmatpush1.msra.mxu0 0.0
    %1034 = vmatprep.subr.mxu0 0.0
    %1035 = vmatpush1.msra.mxu0 0.0
    %1036 = vmatprep.subr.mxu0 0.0
    %1037 = vmatpush1.msra.mxu0 0.0
    %1038 = vmatprep.subr.mxu0 0.0
    %1039 = vmatpush1.msra.mxu0 0.0
    %1040 = vmatprep.subr.mxu0 0.0
    %1041 = vmatpush1.msra.mxu0 0.0
    %1042 = vmatprep.subr.mxu0 0.0
    %1043 = vmatpush1.msra.mxu0 0.0
    %1044 = vmatprep.subr.mxu0 0.0
    %1045 = vmatpush1.msra.mxu0 0.0
    %1046 = vmatprep.subr.mxu0 0.0
    %1047 = vmatpush1.msra.mxu0 0.0
    %1048 = vmatprep.subr.mxu0 0.0
    %1049 = vmatpush1.msra.mxu0 0.0
    %1050 = vmatprep.subr.mxu0 0.0
    %1051 = vmatpush1.msra.mxu0 0.0
    %1052 = vmatprep.subr.mxu0 0.0
    %1053 = vmatpush1.msra.mxu0 0.0
    %1054 = vmatprep.subr.mxu0 0.0
    %1055 = vmatpush1.msra.mxu0 0.0
    %1056 = vmatprep.subr.mxu0 0.0
    %1057 = vmatpush1.msra.mxu0 0.0
    %1058 = vmatprep.subr.mxu0 0.0
    %1059 = vmatpush1.msra.mxu0 0.0
    %1060 = vmatprep.subr.mxu0 0.0
    %1061 = vmatpush1.msra.mxu0 0.0
    %1062 = vmatprep.subr.mxu0 0.0
    %1063 = vmatpush1.msra.mxu0 0.0
    %1064 = vmatprep.subr.mxu0 0.0
    %1065 = vmatpush1.msra.mxu0 0.0
    %1066 = vmatprep.subr.mxu0 0.0
    %1067 = vmatpush1.msra.mxu0 0.0
    %1068 = vmatprep.subr.mxu0 0.0
    %1069 = vmatpush1.msra.mxu0 0.0
    %1070 = vmatprep.subr.mxu0 0.0
    %1071 = vmatpush1.msra.mxu0 0.0
    %1072 = vmatprep.mubr.f32.mxu0 0.0
    %1073 = vmatmul.mubr.f32.gmra.mrb[0].mxu0 %v294
    %v1074 = vpop.f32.mrb[0].mxu0
    %v1075 = vadd.f32 %v1005, %v1074
    %v1076 = vpop.f32.mrb[0].mxu0
    %1077 = vmatprep.mubr.f32.mxu0 0.0
    %1078 = vmatmul.mubr.f32.gmra.mrb[0].mxu0 %v394
    %v1079 = vpop.f32.mrb[0].mxu0
    %v1080 = vadd.f32 %v1005, %v1079
    %v1081 = vpop.f32.mrb[0].mxu0
    %1082 = vmatprep.mubr.f32.mxu0 0.0
    %1083 = vmatmul.mubr.f32.gmra.mrb[0].mxu0 %v494
    %v1084 = vpop.f32.mrb[0].mxu0
    %v1085 = vadd.f32 %v1005, %v1084
    %v1086 = vpop.f32.mrb[0].mxu0
    %1087 = vmatprep.mubr.f32.mxu0 0.0
    %1088 = vmatmul.mubr.f32.gmra.mrb[0].mxu0 %v594
    %v1089 = vpop.f32.mrb[0].mxu0
    %v1090 = vadd.f32 %v1005, %v1089
    %v1091 = vpop.f32.mrb[0].mxu0
    %1092 = vmatprep.mubr.f32.mxu0 0.0
    %1093 = vmatmul.mubr.f32.gmra.mrb[0].mxu0 %v694
    %v1094 = vpop.f32.mrb[0].mxu0
    %v1095 = vadd.f32 %v1005, %v1094
    %v1096 = vpop.f32.mrb[0].mxu0
    %1097 = vmatprep.mubr.f32.mxu0 0.0
    %1098 = vmatmul.mubr.f32.gmra.mrb[0].mxu0 %v794
    %v1099 = vpop.f32.mrb[0].mxu0
    %v1100 = vadd.f32 %v1005, %v1099
    %v1101 = vpop.f32.mrb[0].mxu0
    %1102 = vmatprep.mubr.f32.mxu0 0.0
    %1103 = vmatmul.mubr.f32.gmra.mrb[0].mxu0 %v894
    %v1104 = vpop.f32.mrb[0].mxu0
    %v1105 = vadd.f32 %v1005, %v1104
    %v1106 = vpop.f32.mrb[0].mxu0
    %1107 = vmatprep.mubr.f32.mxu0 0.0
    %1108 = vmatmul.mubr.f32.gmra.mrb[0].mxu0 %v1006
    %v1109 = vpop.f32.mrb[0].mxu0
    %v1110 = vadd.f32 %v1005, %v1109
    %v1111 = vpop.f32.mrb[0].mxu0
    %1112 = vdwg.mxu0
    %vm1113 = vcmask 64512
    %1114 = vst.msk [vmem:[%s3] sm:$0xff] %vm1113, %v1075
    %1115 = vst.msk [vmem:[%s3 + $0x8] sm:$0xff] %vm1113, %v1080
    %1116 = vst.msk [vmem:[%s3 + $0x10] sm:$0xff] %vm1113, %v1085
    %1117 = vst.msk [vmem:[%s3 + $0x18] sm:$0xff] %vm1113, %v1090
    %1118 = vst.msk [vmem:[%s3 + $0x20] sm:$0xff] %vm1113, %v1095
    %1119 = vst.msk [vmem:[%s3 + $0x28] sm:$0xff] %vm1113, %v1100
    %1120 = vst.msk [vmem:[%s3 + $0x30] sm:$0xff] %vm1113, %v1105
    %1121 = vst.msk [vmem:[%s3 + $0x38] sm:$0xff] %vm1113, %v1110
    // Predicated region
    $region18: #{tpu_custom_call.1} parent=1 // pred_check
      _
    $region19: #{tpu_custom_call.1} parent=1 // pred_check_branch
      %1123 = sbr.rel (0) target = $region21
    $region20: #{tpu_custom_call.1} parent=1 // pred_region
      _
    $region21: #{tpu_custom_call.1} parent=1 // pred_fallthru
      _
    // Predicated region
    $region22: #{tpu_custom_call.1} parent=1 // pred_check
      _
    $region23: #{tpu_custom_call.1} parent=1 // pred_check_branch
      %1125 = sbr.rel (0) target = $region25
    $region24: #{tpu_custom_call.1} parent=1 // pred_region
      %s1127 = ssub.s32 256, 256
      %1128 = vsyncadd [#allocation4], %s1127
      %s1129 = sshll.u32 [#allocation5], 4
      %s1130 = int_to_ptr.vmem [resolvable:$true] %s1129
      %1135 = dma.vmem_to_hbm [thread:$0]  %s1130, 256, %s4, [#allocation4], 128, 128, 8
    $region25: #{tpu_custom_call.1} parent=1 // pred_fallthru
      _
    // Predicated region
    $region26: #{tpu_custom_call.1} parent=1 // pred_check
      _
    $region27: #{tpu_custom_call.1} parent=1 // pred_check_branch
      %1137 = sbr.rel (0) target = $region29
    $region28: #{tpu_custom_call.1} parent=1 // pred_region
      _
    $region29: #{tpu_custom_call.1} parent=1 // pred_fallthru
      _
    // Predicated region
    $region30: #{tpu_custom_call.1} parent=1 // pred_check
      _
    $region31: #{tpu_custom_call.1} parent=1 // pred_check_branch
      %1139 = sbr.rel (0) target = $region33
    $region32: #{tpu_custom_call.1} parent=1 // pred_region
      %1140 = dma.done [#allocation4], 256
    $region33: #{tpu_custom_call.1} parent=1 // pred_fallthru
      _
    %1141 = vsyncpa [#allocation3], 1
    %1142 = vsyncpa [#allocation4], 1

</llo_original>
